<compile_context>
chip_gen: v7x
topology: tpu7x:2x2x1
jax: 0.10.0
libtpu: 0.0.40
codegen_flags: <defaults>
</compile_context>

<pallas_src>
import jax
import jax.numpy as jnp
from jax.experimental import pallas as pl
from jax.experimental.pallas import tpu as pltpu

EPS = 1e-5


def _stats_kernel(x_ref, sum_ref, sq_ref):
    # Accumulate per-row sum / sum-of-squares across the lane-tile grid axis.
    @pl.when(pl.program_id(1) == 0)
    def _():
        sum_ref[...] = jnp.zeros_like(sum_ref)
        sq_ref[...] = jnp.zeros_like(sq_ref)

    x = x_ref[...].astype(jnp.float32)
    sum_ref[...] += jnp.sum(x, axis=-1, keepdims=True)
    sq_ref[...] += jnp.sum(x * x, axis=-1, keepdims=True)


def _norm_kernel(x_ref, scale_ref, shift_ref, o_ref):
    # Pure memory-bound FMA: y = x * scale[row] + shift[row].
    x = x_ref[...].astype(jnp.float32)
    o_ref[...] = (x * scale_ref[...] + shift_ref[...]).astype(o_ref.dtype)


def _pick_block(dim, quantum, max_size):
    """Largest multiple of `quantum` dividing `dim` that is <= max_size.

    Falls back to the full `dim` (always a legal block extent) when `dim` is
    not a multiple of `quantum` or no divisor fits the budget.
    """
    if dim % quantum != 0:
        return dim
    best = None
    b = quantum
    limit = min(dim, max_size)
    while b <= limit:
        if dim % b == 0:
            best = b
        b += quantum
    return best if best is not None else dim


def batchnorm3d(x, gamma, beta, *, eps=EPS, max_block_bytes=1 << 20):
    """Training-mode BatchNorm3d forward. x: (B, C, D, H, W); gamma/beta: (C,)."""
    B, C, D, H, W = x.shape
    S = D * H * W
    rows = B * C
    itemsize = jnp.dtype(x.dtype).itemsize

    # Free reshape: NCDHW is already (b, c)-major with DHW contiguous.
    x2d = x.reshape(rows, S)

    # Block sizing: sublanes packed with B*C rows; lane dim tiled so one block
    # stays ~<= max_block_bytes (double-buffered by the Pallas pipeline).
    rb = _pick_block(rows, 8, 512)
    lane_budget = max(128, max_block_bytes // max(rb * itemsize, 1))
    ts = _pick_block(S, 128, lane_budget)
    grid = (rows // rb, S // ts)

    # ---- Pass 1: per-row sum / sum-of-squares (single read of x) ----------
    stats_cost = pl.CostEstimate(
        flops=3 * rows * S,
        transcendentals=0,
        bytes_accessed=rows * S * itemsize + 2 * rows * 4,
    )
    row_sum, row_sq = pl.pallas_call(
        _stats_kernel,
        grid=grid,
        in_specs=[pl.BlockSpec((rb, ts), lambda r, s: (r, s))],
        out_specs=(
            pl.BlockSpec((rb, 1), lambda r, s: (r, 0)),
            pl.BlockSpec((rb, 1), lambda r, s: (r, 0)),
        ),
        out_shape=(
            jax.ShapeDtypeStruct((rows, 1), jnp.float32),
            jax.ShapeDtypeStruct((rows, 1), jnp.float32),
        ),
        compiler_params=pltpu.CompilerParams(
            dimension_semantics=("parallel", "arbitrary")),
        cost_estimate=stats_cost,
    )(x2d)

    # ---- Tiny per-channel math in plain JAX (C elements) -------------------
    count = B * S
    ch_sum = row_sum.reshape(B, C).sum(axis=0)
    ch_sq = row_sq.reshape(B, C).sum(axis=0)
    mean = ch_sum / count
    var = jnp.maximum(ch_sq / count - mean * mean, 0.0)  # clamp cancellation
    inv = jax.lax.rsqrt(var + eps)
    scale_c = gamma.astype(jnp.float32) * inv            # (C,)
    shift_c = beta.astype(jnp.float32) - mean * scale_c  # (C,)
    # Row order in x2d is b*C + c, so tiling over B reproduces it.
    scale_rows = jnp.tile(scale_c, B).reshape(rows, 1)
    shift_rows = jnp.tile(shift_c, B).reshape(rows, 1)

    # ---- Pass 2: fused normalize (read x once, write y once) --------------
    norm_cost = pl.CostEstimate(
        flops=2 * rows * S,
        transcendentals=0,
        bytes_accessed=2 * rows * S * itemsize + 2 * rows * 4,
    )
    out2d = pl.pallas_call(
        _norm_kernel,
        grid=grid,
        in_specs=[
            pl.BlockSpec((rb, ts), lambda r, s: (r, s)),
            pl.BlockSpec((rb, 1), lambda r, s: (r, 0)),   # resident, one DMA
            pl.BlockSpec((rb, 1), lambda r, s: (r, 0)),   # resident, one DMA
        ],
        out_specs=pl.BlockSpec((rb, ts), lambda r, s: (r, s)),
        out_shape=jax.ShapeDtypeStruct((rows, S), x.dtype),
        compiler_params=pltpu.CompilerParams(
            dimension_semantics=("parallel", "parallel")),
        cost_estimate=norm_cost,
    )(x2d, scale_rows, shift_rows)

    # TODO(synk): nn.BatchNorm3d training-mode side effect (running_mean /
    # running_var updates with unbiased variance) is not materialized; only
    # the normalized forward output is returned.
    return out2d.reshape(B, C, D, H, W)


def _reference(x, gamma, beta, eps=EPS):
    # Pure-JAX reference of PyTorch BatchNorm3d (training mode, biased var).
    xf = x.astype(jnp.float32)
    mean = jnp.mean(xf, axis=(0, 2, 3, 4), keepdims=True)
    var = jnp.mean((xf - mean) ** 2, axis=(0, 2, 3, 4), keepdims=True)
    g = gamma.reshape(1, -1, 1, 1, 1).astype(jnp.float32)
    b = beta.reshape(1, -1, 1, 1, 1).astype(jnp.float32)
    return ((xf - mean) * jax.lax.rsqrt(var + eps) * g + b).astype(x.dtype)


if __name__ == "__main__":
    key = jax.random.PRNGKey(0)
    B, C, D, H, W = 2, 4, 8, 16, 16
    kx, kg, kb = jax.random.split(key, 3)
    x = jax.random.normal(kx, (B, C, D, H, W), dtype=jnp.float32) * 2.0 + 0.5

    # nn.BatchNorm3d.__init__: weight = 1, bias = 0.
    gamma = jnp.ones((C,), dtype=jnp.float32)
    beta = jnp.zeros((C,), dtype=jnp.float32)
    ref = _reference(x, gamma, beta)

    # Default tiling (at this toy size the slab fits in one block).
    out = batchnorm3d(x, gamma, beta)
    jax.block_until_ready(out)
    assert out.shape == (B, C, D, H, W)
    assert jnp.allclose(out, ref, atol=1e-4, rtol=1e-4), \
        float(jnp.max(jnp.abs(out - ref)))

    # Small block budget -> multiple lane tiles: exercises the two-phase
    # accumulate/normalize grid path.
    out_tiled = batchnorm3d(x, gamma, beta, max_block_bytes=16 * 1024)
    jax.block_until_ready(out_tiled)
    assert jnp.allclose(out_tiled, ref, atol=1e-4, rtol=1e-4), \
        float(jnp.max(jnp.abs(out_tiled - ref)))

    # Non-trivial affine parameters to cover the gamma/beta fold.
    g2 = jax.random.normal(kg, (C,), dtype=jnp.float32) * 0.5 + 1.0
    b2 = jax.random.normal(kb, (C,), dtype=jnp.float32)
    out_affine = batchnorm3d(x, g2, b2, max_block_bytes=16 * 1024)
    jax.block_until_ready(out_affine)
    ref_affine = _reference(x, g2, b2)
    assert jnp.allclose(out_affine, ref_affine, atol=1e-4, rtol=1e-4), \
        float(jnp.max(jnp.abs(out_affine - ref_affine)))

    print("KERNEL_OK")
</pallas_src>

<mosaic_0001>
module attributes {stable_mosaic.version = 11 : i64} {
  func.func @_stats_kernel(%arg0: i32, %arg1: i32, %arg2: memref<8x2048xf32, #tpu.memory_space<vmem>>, %arg3: memref<8x1xf32, #tpu.memory_space<vmem>>, %arg4: memref<8x1xf32, #tpu.memory_space<vmem>>) attributes {dimension_semantics = [#tpu.dimension_semantics<parallel>, #tpu.dimension_semantics<arbitrary>], iteration_bounds = array<i64: 1, 1>, scalar_prefetch = 0 : i64, scratch_operands = 0 : i64, tpu.core_type = #tpu.core_type<tc>, window_params = [{transform_indices = @transform_0, window_bounds = array<i64: 8, 2048>}, {transform_indices = @transform_1, window_bounds = array<i64: 8, 1>}, {transform_indices = @transform_2, window_bounds = array<i64: 8, 1>}]} {
    %c0_i32 = arith.constant 0 : i32
    %0 = arith.cmpi eq, %arg1, %c0_i32 : i32
    %1 = arith.extui %0 : i1 to i32
    %c0_i32_0 = arith.constant 0 : i32
    %2 = arith.cmpi ne, %1, %c0_i32_0 : i32
    scf.if %2 {
      %cst_11 = arith.constant 0.000000e+00 : f32
      %15 = vector.broadcast %cst_11 : f32 to vector<8x1xf32>
      %c0_12 = arith.constant 0 : index
      %c0_13 = arith.constant 0 : index
      %16 = vector.load %arg3[%c0_12, %c0_13] : memref<8x1xf32, #tpu.memory_space<vmem>>, vector<8x1xf32>
      tpu.vector_store %arg3[%c0_12, %c0_13], %15 {strides = array<i32>} : memref<8x1xf32, #tpu.memory_space<vmem>>, vector<8x1xf32>,
      %cst_14 = arith.constant 0.000000e+00 : f32
      %17 = vector.broadcast %cst_14 : f32 to vector<8x1xf32>
      %c0_15 = arith.constant 0 : index
      %c0_16 = arith.constant 0 : index
      %18 = vector.load %arg4[%c0_15, %c0_16] : memref<8x1xf32, #tpu.memory_space<vmem>>, vector<8x1xf32>
      tpu.vector_store %arg4[%c0_15, %c0_16], %17 {strides = array<i32>} : memref<8x1xf32, #tpu.memory_space<vmem>>, vector<8x1xf32>,
    } else {
    }
    %c0 = arith.constant 0 : index
    %c0_1 = arith.constant 0 : index
    %3 = vector.load %arg2[%c0, %c0_1] : memref<8x2048xf32, #tpu.memory_space<vmem>>, vector<8x2048xf32>
    %c0_2 = arith.constant 0 : index
    %c0_3 = arith.constant 0 : index
    %4 = vector.load %arg3[%c0_2, %c0_3] : memref<8x1xf32, #tpu.memory_space<vmem>>, vector<8x1xf32>
    %cst = arith.constant dense<0.000000e+00> : vector<8xf32>
    %5 = vector.multi_reduction <add>, %3, %cst [1] : vector<8x2048xf32> to vector<8xf32>
    %6 = vector.shape_cast %5 : vector<8xf32> to vector<8x1xf32>
    %7 = arith.addf %4, %6 : vector<8x1xf32>
    %c0_4 = arith.constant 0 : index
    %c0_5 = arith.constant 0 : index
    %8 = vector.load %arg3[%c0_4, %c0_5] : memref<8x1xf32, #tpu.memory_space<vmem>>, vector<8x1xf32>
    tpu.vector_store %arg3[%c0_4, %c0_5], %7 {strides = array<i32>} : memref<8x1xf32, #tpu.memory_space<vmem>>, vector<8x1xf32>,
    %c0_6 = arith.constant 0 : index
    %c0_7 = arith.constant 0 : index
    %9 = vector.load %arg4[%c0_6, %c0_7] : memref<8x1xf32, #tpu.memory_space<vmem>>, vector<8x1xf32>
    %10 = arith.mulf %3, %3 : vector<8x2048xf32>
    %cst_8 = arith.constant dense<0.000000e+00> : vector<8xf32>
    %11 = vector.multi_reduction <add>, %10, %cst_8 [1] : vector<8x2048xf32> to vector<8xf32>
    %12 = vector.shape_cast %11 : vector<8xf32> to vector<8x1xf32>
    %13 = arith.addf %9, %12 : vector<8x1xf32>
    %c0_9 = arith.constant 0 : index
    %c0_10 = arith.constant 0 : index
    %14 = vector.load %arg4[%c0_9, %c0_10] : memref<8x1xf32, #tpu.memory_space<vmem>>, vector<8x1xf32>
    tpu.vector_store %arg4[%c0_9, %c0_10], %13 {strides = array<i32>} : memref<8x1xf32, #tpu.memory_space<vmem>>, vector<8x1xf32>,
    return
  }
  func.func @transform_0(%arg0: i32, %arg1: i32) -> (i32, i32) {
    %c0_i32 = arith.constant 0 : i32
    return %arg0, %arg1 : i32, i32
  }
  func.func @transform_1(%arg0: i32, %arg1: i32) -> (i32, i32) {
    %c0_i32 = arith.constant 0 : i32
    %c0_i32_0 = arith.constant 0 : i32
    return %arg0, %c0_i32 : i32, i32
  }
  func.func @transform_2(%arg0: i32, %arg1: i32) -> (i32, i32) {
    %c0_i32 = arith.constant 0 : i32
    %c0_i32_0 = arith.constant 0 : i32
    return %arg0, %c0_i32 : i32, i32
  }
}

</mosaic_0001>

<llo_original>
// kernel: tpu_custom_call.1
$region0: #{tpu_custom_call.1}
  #allocation0 [shape = 'u32[]', space=smem, size = 0x4, offset = 0x4, fixed_abs, tag = 'smem constant byte address 0x4 - core index']
  #allocation1 [shape = 'u32[144,128]{1,0:T(1,128)}', space=vmem, size = 0x12000, scoped, tag = 'internal scratch']
  %s0 = inlined_call_operand.hbm [shape: f32[8,2048], index: 0, kind: input, shape index: {}]
  %s1 = inlined_call_operand.vmem [shape: f32[8,1], index: 1, kind: output, shape index: {0}]
  %s2 = inlined_call_operand.vmem [shape: f32[8,1], index: 2, kind: output, shape index: {1}]
  %3 = xla_tuple %s1, %s2
  %s4 = sld [smem:[#allocation0]]
  $region30: #{tpu_custom_call.1} parent=0
    _
  %s6 = ssub.s32 1, %s4
  %s7 = scalar_select 0, %s6, %s4
  $region1: #{tpu_custom_call.1} parent=0
    #allocation2 [shape = 'u8[65536]{0}', space=vmem, size = 0x10000, scoped, tag = 'input window, operand 0, single buffered']
    #allocation3 [shape = 's32[1]{0}', space=sflag, size = 0x4, scoped, tag = 'scoped memory for tpu_custom_call.1']
    %8 = vsyncpa [#allocation3], 0
    // Predicated region
    $region2: #{tpu_custom_call.1} parent=1 // pred_check
      _
    $region3: #{tpu_custom_call.1} parent=1 // pred_check_branch
      %10 = sbr.rel (0) target = $region5
    $region4: #{tpu_custom_call.1} parent=1 // pred_region
      %s12 = ssub.s32 2048, 2048
      %13 = vsyncadd [#allocation3], %s12
      %s15 = sshll.u32 [#allocation2], 4
      %s16 = int_to_ptr.vmem [resolvable:$true] %s15
      %18 = dma.hbm_to_vmem [thread:$0]  %s0, 2048, %s16, [#allocation3]
    $region5: #{tpu_custom_call.1} parent=1 // pred_fallthru
      _
    // Predicated region
    $region6: #{tpu_custom_call.1} parent=1 // pred_check
      _
    $region7: #{tpu_custom_call.1} parent=1 // pred_check_branch
      %20 = sbr.rel (0) target = $region9
    $region8: #{tpu_custom_call.1} parent=1 // pred_region
      %21 = dma.done [#allocation3], 2048
    $region9: #{tpu_custom_call.1} parent=1 // pred_fallthru
      _
    %p22 = scmp.eq.s32.totalorder 0, 0
    // Predicated region
    $region10: #{tpu_custom_call.1} parent=1 // pred_check
      %p23 = pneg %p22
    $region11: #{tpu_custom_call.1} parent=1 // pred_check_branch
      %25 = sbr.rel (%p23) target = $region13
    $region12: #{tpu_custom_call.1} parent=1 // pred_region
      %vm26 = vcmask 7168
      %27 = vst.msk [vmem:[%s1] sm:$0xff] %vm26, 0.0
      %28 = vst.msk [vmem:[%s2] sm:$0xff] %vm26, 0.0
    $region13: #{tpu_custom_call.1} parent=1 // pred_fallthru
      _
    %v29 = vld [vmem:[#allocation2] sm:$0xff]
    %v30 = vld [vmem:[#allocation2 + $0x8] sm:$0xff]
    %v31 = vld [vmem:[#allocation2 + $0x10] sm:$0xff]
    %v32 = vld [vmem:[#allocation2 + $0x18] sm:$0xff]
    %v33 = vld [vmem:[#allocation2 + $0x20] sm:$0xff]
    %v34 = vld [vmem:[#allocation2 + $0x28] sm:$0xff]
    %v35 = vld [vmem:[#allocation2 + $0x30] sm:$0xff]
    %v36 = vld [vmem:[#allocation2 + $0x38] sm:$0xff]
    %v37 = vld [vmem:[#allocation2 + $0x40] sm:$0xff]
    %v38 = vld [vmem:[#allocation2 + $0x48] sm:$0xff]
    %v39 = vld [vmem:[#allocation2 + $0x50] sm:$0xff]
    %v40 = vld [vmem:[#allocation2 + $0x58] sm:$0xff]
    %v41 = vld [vmem:[#allocation2 + $0x60] sm:$0xff]
    %v42 = vld [vmem:[#allocation2 + $0x68] sm:$0xff]
    %v43 = vld [vmem:[#allocation2 + $0x70] sm:$0xff]
    %v44 = vld [vmem:[#allocation2 + $0x78] sm:$0xff]
    %v45 = vld [vmem:[%s1] sm:$0xff]
    %v46 = vadd.f32 %v29, %v30
    %v47 = vadd.f32 %v46, %v31
    %v48 = vadd.f32 %v47, %v32
    %v49 = vadd.f32 %v48, %v33
    %v50 = vadd.f32 %v49, %v34
    %v51 = vadd.f32 %v50, %v35
    %v52 = vadd.f32 %v51, %v36
    %v53 = vadd.f32 %v52, %v37
    %v54 = vadd.f32 %v53, %v38
    %v55 = vadd.f32 %v54, %v39
    %v56 = vadd.f32 %v55, %v40
    %v57 = vadd.f32 %v56, %v41
    %v58 = vadd.f32 %v57, %v42
    %v59 = vadd.f32 %v58, %v43
    %v60 = vadd.f32 %v59, %v44
    %61 = vadd.xlane.f32.xlu0 %v60
    %v62 = vpop.xlane.xlu0 %61
    %v63 = vadd.f32 %v45, %v62
    %vm64 = vcmask 7168
    %65 = vst.msk [vmem:[%s1] sm:$0xff] %vm64, %v63
    %v66 = vld [vmem:[%s2] sm:$0xff]
    %v67 = vmul.f32 %v29, %v29
    %v68 = vmul.f32 %v30, %v30
    %v69 = vmul.f32 %v31, %v31
    %v70 = vmul.f32 %v32, %v32
    %v71 = vmul.f32 %v33, %v33
    %v72 = vmul.f32 %v34, %v34
    %v73 = vmul.f32 %v35, %v35
    %v74 = vmul.f32 %v36, %v36
    %v75 = vmul.f32 %v37, %v37
    %v76 = vmul.f32 %v38, %v38
    %v77 = vmul.f32 %v39, %v39
    %v78 = vmul.f32 %v40, %v40
    %v79 = vmul.f32 %v41, %v41
    %v80 = vmul.f32 %v42, %v42
    %v81 = vmul.f32 %v43, %v43
    %v82 = vmul.f32 %v44, %v44
    %v83 = vadd.f32 %v67, %v68
    %v84 = vadd.f32 %v83, %v69
    %v85 = vadd.f32 %v84, %v70
    %v86 = vadd.f32 %v85, %v71
    %v87 = vadd.f32 %v86, %v72
    %v88 = vadd.f32 %v87, %v73
    %v89 = vadd.f32 %v88, %v74
    %v90 = vadd.f32 %v89, %v75
    %v91 = vadd.f32 %v90, %v76
    %v92 = vadd.f32 %v91, %v77
    %v93 = vadd.f32 %v92, %v78
    %v94 = vadd.f32 %v93, %v79
    %v95 = vadd.f32 %v94, %v80
    %v96 = vadd.f32 %v95, %v81
    %v97 = vadd.f32 %v96, %v82
    %98 = vadd.xlane.f32.xlu0 %v97
    %v99 = vpop.xlane.xlu0 %98
    %v100 = vadd.f32 %v66, %v99
    %101 = vst.msk [vmem:[%s2] sm:$0xff] %vm64, %v100
    // Predicated region
    $region14: #{tpu_custom_call.1} parent=1 // pred_check
      _
    $region15: #{tpu_custom_call.1} parent=1 // pred_check_branch
      %103 = sbr.rel (0) target = $region17
    $region16: #{tpu_custom_call.1} parent=1 // pred_region
      _
    $region17: #{tpu_custom_call.1} parent=1 // pred_fallthru
      _
    // Predicated region
    $region18: #{tpu_custom_call.1} parent=1 // pred_check
      _
    $region19: #{tpu_custom_call.1} parent=1 // pred_check_branch
      %105 = sbr.rel (0) target = $region21
    $region20: #{tpu_custom_call.1} parent=1 // pred_region
      _
    $region21: #{tpu_custom_call.1} parent=1 // pred_fallthru
      _
    // Predicated region
    $region22: #{tpu_custom_call.1} parent=1 // pred_check
      _
    $region23: #{tpu_custom_call.1} parent=1 // pred_check_branch
      %107 = sbr.rel (0) target = $region25
    $region24: #{tpu_custom_call.1} parent=1 // pred_region
      _
    $region25: #{tpu_custom_call.1} parent=1 // pred_fallthru
      _
    // Predicated region
    $region26: #{tpu_custom_call.1} parent=1 // pred_check
      _
    $region27: #{tpu_custom_call.1} parent=1 // pred_check_branch
      %109 = sbr.rel (0) target = $region29
    $region28: #{tpu_custom_call.1} parent=1 // pred_region
      _
    $region29: #{tpu_custom_call.1} parent=1 // pred_fallthru
      _
    %110 = vsyncpa [#allocation3], 1

</llo_original>
